<compile_context>
chip_gen: v7x
topology: tpu7x:2x2x1
jax: 0.10.0
libtpu: 0.0.40
codegen_flags: <defaults>
</compile_context>

<pallas_src>
import jax
import jax.numpy as jnp
from jax import lax
from jax.experimental import pallas as pl
from jax.experimental.pallas import tpu as pltpu


# ---------------- in-kernel helpers ----------------
# Zero-padded static shifts implemented as slice+concat (proven lowering on Mosaic).
# zrow / zcol are hoisted by the caller and reused for every shift.

def _vshift(x, dy, zrow):
    """result[i, j] = x[i + dy, j] if in-bounds else 0, dy in {-1, +1}."""
    if dy == 1:
        return jnp.concatenate([x[1:, :], zrow], axis=0)
    return jnp.concatenate([zrow, x[:-1, :]], axis=0)


def _hshift(x, dx, zcol):
    """result[i, j] = x[i, j + dx] if in-bounds else 0, dx in {-1, +1}."""
    if dx == 1:
        return jnp.concatenate([x[:, 1:], zcol], axis=1)
    return jnp.concatenate([zcol, x[:, :-1]], axis=1)


def _sobel_grad(x, zrow, zcol):
    """|conv(x, sobel_x)| + |conv(x, sobel_y)| with zero padding=1 (cross-correlation,
    matching torch.nn.functional.conv2d), computed as separable 1-D passes.

    kernelx = [[-1,0,1],[-2,0,2],[-1,0,1]]  = [1,2,1]^T (rows) x [-1,0,1] (cols)
    kernely = [[1,2,1],[0,0,0],[-1,-2,-1]]  = [1,0,-1]^T (rows) x [ 1,2,1] (cols)
    """
    up = _vshift(x, -1, zrow)   # x[i-1, j]
    dn = _vshift(x, +1, zrow)   # x[i+1, j]
    s_y = up + 2.0 * x + dn     # vertical smooth [1,2,1]
    d_y = up - dn               # vertical diff   [1,0,-1]
    # sobelx = horizontal diff [-1,0,1] applied to the vertically smoothed image
    sobelx = _hshift(s_y, +1, zcol) - _hshift(s_y, -1, zcol)
    # sobely = horizontal smooth [1,2,1] applied to the vertical difference
    sobely = _hshift(d_y, -1, zcol) + 2.0 * d_y + _hshift(d_y, +1, zcol)
    return jnp.abs(sobelx) + jnp.abs(sobely)


# ---------------- Pallas kernel ----------------

def fusion_loss_kernel(ir_ref, vis_ref, gen_ref, in_part_ref, grad_part_ref):
    f32 = jnp.float32
    ir = ir_ref[...].astype(f32)    # (H, W)
    y = vis_ref[...].astype(f32)    # (H, W)  -- channel 0 selected via BlockSpec
    gen = gen_ref[...].astype(f32)  # (H, W)
    H, W = ir.shape

    # Hoisted zero pads, shared by all shifts of all three images this step.
    zrow = jnp.zeros((1, W), f32)
    zcol = jnp.zeros((H, 1), f32)

    # Intensity term: |max(y, ir) - gen|, row-reduced; lanes + batch summed in wrapper.
    in_abs = jnp.abs(jnp.maximum(y, ir) - gen)
    in_part_ref[...] = jnp.sum(in_abs, axis=0, keepdims=True)           # (1, W)

    # Gradient term: |max(sobel(y), sobel(ir)) - sobel(gen)|, row-reduced.
    y_g = _sobel_grad(y, zrow, zcol)
    ir_g = _sobel_grad(ir, zrow, zcol)
    gen_g = _sobel_grad(gen, zrow, zcol)
    grad_abs = jnp.abs(jnp.maximum(y_g, ir_g) - gen_g)
    grad_part_ref[...] = jnp.sum(grad_abs, axis=0, keepdims=True)       # (1, W)


# ---------------- wrapper ----------------

def fusion_loss(image_ir, image_vis, generate_img):
    """Inputs are NCHW (image_ir: (N,1,H,W), image_vis: (N,C,H,W), generate_img: (N,1,H,W)).
    Returns (loss_total, loss_in, loss_grad) as f32 scalars.
    Inputs may be float32 or bfloat16; accumulation is in float32."""
    N, _, H, W = image_ir.shape

    # Whole-image f32 blocks, 3 inputs double-buffered + in-kernel temporaries.
    block_bytes = H * W * 4
    vmem_limit = int(min(64 * 1024 * 1024, max(16 * 1024 * 1024, 24 * block_bytes)))

    part_in, part_grad = pl.pallas_call(
        fusion_loss_kernel,
        out_shape=(
            jax.ShapeDtypeStruct((N, 1, W), jnp.float32),
            jax.ShapeDtypeStruct((N, 1, W), jnp.float32),
        ),
        grid_spec=pltpu.PrefetchScalarGridSpec(
            num_scalar_prefetch=0,
            grid=(N,),
            in_specs=[
                # (N, 1, H, W): batch b, channel 0 -> kernel sees (H, W)
                pl.BlockSpec((None, None, H, W), lambda b: (b, 0, 0, 0)),
                # (N, C, H, W): channel 0 selected here (no wrapper slice / extra HBM pass)
                pl.BlockSpec((None, None, H, W), lambda b: (b, 0, 0, 0)),
                pl.BlockSpec((None, None, H, W), lambda b: (b, 0, 0, 0)),
            ],
            out_specs=[
                pl.BlockSpec((None, 1, W), lambda b: (b, 0, 0)),
                pl.BlockSpec((None, 1, W), lambda b: (b, 0, 0)),
            ],
        ),
        compiler_params=pltpu.CompilerParams(
            # Per-step partial outputs -> no cross-step dependency -> parallel grid
            # (lets v7x run batch elements on both TensorCores).
            dimension_semantics=("parallel",),
            vmem_limit_bytes=vmem_limit,
        ),
    )(image_ir, image_vis, generate_img)

    denom = jnp.float32(N * H * W)
    loss_in = jnp.sum(part_in) / denom        # F.l1_loss default reduction='mean'
    loss_grad = jnp.sum(part_grad) / denom
    loss_total = loss_in + 10.0 * loss_grad
    return loss_total, loss_in, loss_grad


# ---------------- pure-JAX reference (for validation only) ----------------

def _ref_sobel(x_nchw):
    kx = jnp.array([[-1., 0., 1.], [-2., 0., 2.], [-1., 0., 1.]], jnp.float32)
    ky = jnp.array([[1., 2., 1.], [0., 0., 0.], [-1., -2., -1.]], jnp.float32)
    kx = kx[None, None]
    ky = ky[None, None]
    dn = lax.conv_dimension_numbers(x_nchw.shape, kx.shape, ("NCHW", "OIHW", "NCHW"))
    sx = lax.conv_general_dilated(x_nchw, kx, (1, 1), ((1, 1), (1, 1)), dimension_numbers=dn)
    sy = lax.conv_general_dilated(x_nchw, ky, (1, 1), ((1, 1), (1, 1)), dimension_numbers=dn)
    return jnp.abs(sx) + jnp.abs(sy)


def _ref_fusion_loss(image_ir, image_vis, generate_img):
    image_y = image_vis[:, :1, :, :]
    x_in_max = jnp.maximum(image_y, image_ir)
    loss_in = jnp.mean(jnp.abs(x_in_max - generate_img))
    y_grad = _ref_sobel(image_y)
    ir_grad = _ref_sobel(image_ir)
    gen_grad = _ref_sobel(generate_img)
    loss_grad = jnp.mean(jnp.abs(jnp.maximum(y_grad, ir_grad) - gen_grad))
    return loss_in + 10.0 * loss_grad, loss_in, loss_grad


# ---------------- main ----------------

if __name__ == "__main__":
    key = jax.random.PRNGKey(0)
    k1, k2, k3 = jax.random.split(key, 3)
    # Small but lane-dense demo shapes: W multiple of 128 (vreg lanes), H multiple of 8.
    N, C, H, W = 2, 3, 16, 128
    image_ir = jax.random.uniform(k1, (N, 1, H, W), jnp.float32)
    image_vis = jax.random.uniform(k2, (N, C, H, W), jnp.float32)
    generate_img = jax.random.uniform(k3, (N, 1, H, W), jnp.float32)

    loss_total, loss_in, loss_grad = jax.block_until_ready(
        fusion_loss(image_ir, image_vis, generate_img))

    ref_total, ref_in, ref_grad = _ref_fusion_loss(image_ir, image_vis, generate_img)
    assert jnp.allclose(loss_in, ref_in, atol=1e-5, rtol=1e-5), (loss_in, ref_in)
    assert jnp.allclose(loss_grad, ref_grad, atol=1e-5, rtol=1e-5), (loss_grad, ref_grad)
    assert jnp.allclose(loss_total, ref_total, atol=1e-4, rtol=1e-5), (loss_total, ref_total)

    print("KERNEL_OK")
</pallas_src>

<mosaic_0001>
module attributes {stable_mosaic.version = 11 : i64} {
  func.func @fusion_loss_kernel(%arg0: i32, %arg1: memref<1x1x16x128xf32, #tpu.memory_space<vmem>>, %arg2: memref<1x1x16x128xf32, #tpu.memory_space<vmem>>, %arg3: memref<1x1x16x128xf32, #tpu.memory_space<vmem>>, %arg4: memref<1x1x128xf32, #tpu.memory_space<vmem>>, %arg5: memref<1x1x128xf32, #tpu.memory_space<vmem>>) attributes {dimension_semantics = [#tpu.dimension_semantics<parallel>], iteration_bounds = array<i64: 2>, scalar_prefetch = 0 : i64, scratch_operands = 0 : i64, tpu.core_type = #tpu.core_type<tc>, window_params = [{transform_indices = @transform_0, window_bounds = array<i64: 1, 1, 16, 128>}, {transform_indices = @transform_1, window_bounds = array<i64: 1, 1, 16, 128>}, {transform_indices = @transform_2, window_bounds = array<i64: 1, 1, 16, 128>}, {transform_indices = @transform_3, window_bounds = array<i64: 1, 1, 128>}, {transform_indices = @transform_4, window_bounds = array<i64: 1, 1, 128>}]} {
    %c0 = arith.constant 0 : index
    %c0_0 = arith.constant 0 : index
    %c0_1 = arith.constant 0 : index
    %c0_2 = arith.constant 0 : index
    %0 = vector.load %arg1[%c0, %c0_0, %c0_1, %c0_2] : memref<1x1x16x128xf32, #tpu.memory_space<vmem>>, vector<1x1x16x128xf32>
    %1 = vector.shape_cast %0 : vector<1x1x16x128xf32> to vector<16x128xf32>
    %c0_3 = arith.constant 0 : index
    %c0_4 = arith.constant 0 : index
    %c0_5 = arith.constant 0 : index
    %c0_6 = arith.constant 0 : index
    %2 = vector.load %arg2[%c0_3, %c0_4, %c0_5, %c0_6] : memref<1x1x16x128xf32, #tpu.memory_space<vmem>>, vector<1x1x16x128xf32>
    %3 = vector.shape_cast %2 : vector<1x1x16x128xf32> to vector<16x128xf32>
    %c0_7 = arith.constant 0 : index
    %c0_8 = arith.constant 0 : index
    %c0_9 = arith.constant 0 : index
    %c0_10 = arith.constant 0 : index
    %4 = vector.load %arg3[%c0_7, %c0_8, %c0_9, %c0_10] : memref<1x1x16x128xf32, #tpu.memory_space<vmem>>, vector<1x1x16x128xf32>
    %5 = vector.shape_cast %4 : vector<1x1x16x128xf32> to vector<16x128xf32>
    %cst = arith.constant 0.000000e+00 : f32
    %6 = vector.broadcast %cst : f32 to vector<1x128xf32>
    %cst_11 = arith.constant 0.000000e+00 : f32
    %7 = vector.broadcast %cst_11 : f32 to vector<16x1xf32>
    %8 = arith.maximumf %3, %1 : vector<16x128xf32>
    %9 = arith.subf %8, %5 : vector<16x128xf32>
    %10 = math.absf %9 : vector<16x128xf32>
    %cst_12 = arith.constant dense<0.000000e+00> : vector<128xf32>
    %11 = vector.multi_reduction <add>, %10, %cst_12 [0] : vector<16x128xf32> to vector<128xf32>
    %12 = vector.shape_cast %11 : vector<128xf32> to vector<1x128xf32>
    %c0_13 = arith.constant 0 : index
    %c0_14 = arith.constant 0 : index
    %c0_15 = arith.constant 0 : index
    %13 = vector.load %arg4[%c0_13, %c0_14, %c0_15] : memref<1x1x128xf32, #tpu.memory_space<vmem>>, vector<1x1x128xf32>
    %14 = vector.shape_cast %13 : vector<1x1x128xf32> to vector<1x128xf32>
    %15 = vector.shape_cast %12 : vector<1x128xf32> to vector<1x1x128xf32>
    tpu.vector_store %arg4[%c0_13, %c0_14, %c0_15], %15 {strides = array<i32>} : memref<1x1x128xf32, #tpu.memory_space<vmem>>, vector<1x1x128xf32>,
    %16 = vector.extract_strided_slice %3 {offsets = [0, 0], sizes = [15, 128], strides = [1, 1]} : vector<16x128xf32> to vector<15x128xf32>
    %17 = tpu.concatenate %6, %16 in 0 : vector<1x128xf32>, vector<15x128xf32> -> vector<16x128xf32>
    %18 = vector.extract_strided_slice %3 {offsets = [1, 0], sizes = [15, 128], strides = [1, 1]} : vector<16x128xf32> to vector<15x128xf32>
    %19 = tpu.concatenate %18, %6 in 0 : vector<15x128xf32>, vector<1x128xf32> -> vector<16x128xf32>
    %cst_16 = arith.constant 2.000000e+00 : f32
    %20 = vector.broadcast %cst_16 : f32 to vector<16x128xf32>
    %21 = arith.mulf %20, %3 : vector<16x128xf32>
    %22 = arith.addf %17, %21 : vector<16x128xf32>
    %23 = arith.addf %22, %19 : vector<16x128xf32>
    %24 = arith.subf %17, %19 : vector<16x128xf32>
    %25 = vector.extract_strided_slice %23 {offsets = [0, 1], sizes = [16, 127], strides = [1, 1]} : vector<16x128xf32> to vector<16x127xf32>
    %26 = tpu.concatenate %25, %7 in 1 : vector<16x127xf32>, vector<16x1xf32> -> vector<16x128xf32>
    %27 = vector.extract_strided_slice %23 {offsets = [0, 0], sizes = [16, 127], strides = [1, 1]} : vector<16x128xf32> to vector<16x127xf32>
    %28 = tpu.concatenate %7, %27 in 1 : vector<16x1xf32>, vector<16x127xf32> -> vector<16x128xf32>
    %29 = arith.subf %26, %28 : vector<16x128xf32>
    %30 = vector.extract_strided_slice %24 {offsets = [0, 0], sizes = [16, 127], strides = [1, 1]} : vector<16x128xf32> to vector<16x127xf32>
    %31 = tpu.concatenate %7, %30 in 1 : vector<16x1xf32>, vector<16x127xf32> -> vector<16x128xf32>
    %cst_17 = arith.constant 2.000000e+00 : f32
    %32 = vector.broadcast %cst_17 : f32 to vector<16x128xf32>
    %33 = arith.mulf %32, %24 : vector<16x128xf32>
    %34 = arith.addf %31, %33 : vector<16x128xf32>
    %35 = vector.extract_strided_slice %24 {offsets = [0, 1], sizes = [16, 127], strides = [1, 1]} : vector<16x128xf32> to vector<16x127xf32>
    %36 = tpu.concatenate %35, %7 in 1 : vector<16x127xf32>, vector<16x1xf32> -> vector<16x128xf32>
    %37 = arith.addf %34, %36 : vector<16x128xf32>
    %38 = math.absf %29 : vector<16x128xf32>
    %39 = math.absf %37 : vector<16x128xf32>
    %40 = arith.addf %38, %39 : vector<16x128xf32>
    %41 = vector.extract_strided_slice %1 {offsets = [0, 0], sizes = [15, 128], strides = [1, 1]} : vector<16x128xf32> to vector<15x128xf32>
    %42 = tpu.concatenate %6, %41 in 0 : vector<1x128xf32>, vector<15x128xf32> -> vector<16x128xf32>
    %43 = vector.extract_strided_slice %1 {offsets = [1, 0], sizes = [15, 128], strides = [1, 1]} : vector<16x128xf32> to vector<15x128xf32>
    %44 = tpu.concatenate %43, %6 in 0 : vector<15x128xf32>, vector<1x128xf32> -> vector<16x128xf32>
    %cst_18 = arith.constant 2.000000e+00 : f32
    %45 = vector.broadcast %cst_18 : f32 to vector<16x128xf32>
    %46 = arith.mulf %45, %1 : vector<16x128xf32>
    %47 = arith.addf %42, %46 : vector<16x128xf32>
    %48 = arith.addf %47, %44 : vector<16x128xf32>
    %49 = arith.subf %42, %44 : vector<16x128xf32>
    %50 = vector.extract_strided_slice %48 {offsets = [0, 1], sizes = [16, 127], strides = [1, 1]} : vector<16x128xf32> to vector<16x127xf32>
    %51 = tpu.concatenate %50, %7 in 1 : vector<16x127xf32>, vector<16x1xf32> -> vector<16x128xf32>
    %52 = vector.extract_strided_slice %48 {offsets = [0, 0], sizes = [16, 127], strides = [1, 1]} : vector<16x128xf32> to vector<16x127xf32>
    %53 = tpu.concatenate %7, %52 in 1 : vector<16x1xf32>, vector<16x127xf32> -> vector<16x128xf32>
    %54 = arith.subf %51, %53 : vector<16x128xf32>
    %55 = vector.extract_strided_slice %49 {offsets = [0, 0], sizes = [16, 127], strides = [1, 1]} : vector<16x128xf32> to vector<16x127xf32>
    %56 = tpu.concatenate %7, %55 in 1 : vector<16x1xf32>, vector<16x127xf32> -> vector<16x128xf32>
    %cst_19 = arith.constant 2.000000e+00 : f32
    %57 = vector.broadcast %cst_19 : f32 to vector<16x128xf32>
    %58 = arith.mulf %57, %49 : vector<16x128xf32>
    %59 = arith.addf %56, %58 : vector<16x128xf32>
    %60 = vector.extract_strided_slice %49 {offsets = [0, 1], sizes = [16, 127], strides = [1, 1]} : vector<16x128xf32> to vector<16x127xf32>
    %61 = tpu.concatenate %60, %7 in 1 : vector<16x127xf32>, vector<16x1xf32> -> vector<16x128xf32>
    %62 = arith.addf %59, %61 : vector<16x128xf32>
    %63 = math.absf %54 : vector<16x128xf32>
    %64 = math.absf %62 : vector<16x128xf32>
    %65 = arith.addf %63, %64 : vector<16x128xf32>
    %66 = vector.extract_strided_slice %5 {offsets = [0, 0], sizes = [15, 128], strides = [1, 1]} : vector<16x128xf32> to vector<15x128xf32>
    %67 = tpu.concatenate %6, %66 in 0 : vector<1x128xf32>, vector<15x128xf32> -> vector<16x128xf32>
    %68 = vector.extract_strided_slice %5 {offsets = [1, 0], sizes = [15, 128], strides = [1, 1]} : vector<16x128xf32> to vector<15x128xf32>
    %69 = tpu.concatenate %68, %6 in 0 : vector<15x128xf32>, vector<1x128xf32> -> vector<16x128xf32>
    %cst_20 = arith.constant 2.000000e+00 : f32
    %70 = vector.broadcast %cst_20 : f32 to vector<16x128xf32>
    %71 = arith.mulf %70, %5 : vector<16x128xf32>
    %72 = arith.addf %67, %71 : vector<16x128xf32>
    %73 = arith.addf %72, %69 : vector<16x128xf32>
    %74 = arith.subf %67, %69 : vector<16x128xf32>
    %75 = vector.extract_strided_slice %73 {offsets = [0, 1], sizes = [16, 127], strides = [1, 1]} : vector<16x128xf32> to vector<16x127xf32>
    %76 = tpu.concatenate %75, %7 in 1 : vector<16x127xf32>, vector<16x1xf32> -> vector<16x128xf32>
    %77 = vector.extract_strided_slice %73 {offsets = [0, 0], sizes = [16, 127], strides = [1, 1]} : vector<16x128xf32> to vector<16x127xf32>
    %78 = tpu.concatenate %7, %77 in 1 : vector<16x1xf32>, vector<16x127xf32> -> vector<16x128xf32>
    %79 = arith.subf %76, %78 : vector<16x128xf32>
    %80 = vector.extract_strided_slice %74 {offsets = [0, 0], sizes = [16, 127], strides = [1, 1]} : vector<16x128xf32> to vector<16x127xf32>
    %81 = tpu.concatenate %7, %80 in 1 : vector<16x1xf32>, vector<16x127xf32> -> vector<16x128xf32>
    %cst_21 = arith.constant 2.000000e+00 : f32
    %82 = vector.broadcast %cst_21 : f32 to vector<16x128xf32>
    %83 = arith.mulf %82, %74 : vector<16x128xf32>
    %84 = arith.addf %81, %83 : vector<16x128xf32>
    %85 = vector.extract_strided_slice %74 {offsets = [0, 1], sizes = [16, 127], strides = [1, 1]} : vector<16x128xf32> to vector<16x127xf32>
    %86 = tpu.concatenate %85, %7 in 1 : vector<16x127xf32>, vector<16x1xf32> -> vector<16x128xf32>
    %87 = arith.addf %84, %86 : vector<16x128xf32>
    %88 = math.absf %79 : vector<16x128xf32>
    %89 = math.absf %87 : vector<16x128xf32>
    %90 = arith.addf %88, %89 : vector<16x128xf32>
    %91 = arith.maximumf %40, %65 : vector<16x128xf32>
    %92 = arith.subf %91, %90 : vector<16x128xf32>
    %93 = math.absf %92 : vector<16x128xf32>
    %cst_22 = arith.constant dense<0.000000e+00> : vector<128xf32>
    %94 = vector.multi_reduction <add>, %93, %cst_22 [0] : vector<16x128xf32> to vector<128xf32>
    %95 = vector.shape_cast %94 : vector<128xf32> to vector<1x128xf32>
    %c0_23 = arith.constant 0 : index
    %c0_24 = arith.constant 0 : index
    %c0_25 = arith.constant 0 : index
    %96 = vector.load %arg5[%c0_23, %c0_24, %c0_25] : memref<1x1x128xf32, #tpu.memory_space<vmem>>, vector<1x1x128xf32>
    %97 = vector.shape_cast %96 : vector<1x1x128xf32> to vector<1x128xf32>
    %98 = vector.shape_cast %95 : vector<1x128xf32> to vector<1x1x128xf32>
    tpu.vector_store %arg5[%c0_23, %c0_24, %c0_25], %98 {strides = array<i32>} : memref<1x1x128xf32, #tpu.memory_space<vmem>>, vector<1x1x128xf32>,
    return
  }
  func.func @transform_0(%arg0: i32) -> (i32, i32, i32, i32) {
    %c0_i32 = arith.constant 0 : i32
    %c0_i32_0 = arith.constant 0 : i32
    %c0_i32_1 = arith.constant 0 : i32
    %c0_i32_2 = arith.constant 0 : i32
    return %arg0, %c0_i32, %c0_i32_0, %c0_i32_1 : i32, i32, i32, i32
  }
  func.func @transform_1(%arg0: i32) -> (i32, i32, i32, i32) {
    %c0_i32 = arith.constant 0 : i32
    %c0_i32_0 = arith.constant 0 : i32
    %c0_i32_1 = arith.constant 0 : i32
    %c0_i32_2 = arith.constant 0 : i32
    return %arg0, %c0_i32, %c0_i32_0, %c0_i32_1 : i32, i32, i32, i32
  }
  func.func @transform_2(%arg0: i32) -> (i32, i32, i32, i32) {
    %c0_i32 = arith.constant 0 : i32
    %c0_i32_0 = arith.constant 0 : i32
    %c0_i32_1 = arith.constant 0 : i32
    %c0_i32_2 = arith.constant 0 : i32
    return %arg0, %c0_i32, %c0_i32_0, %c0_i32_1 : i32, i32, i32, i32
  }
  func.func @transform_3(%arg0: i32) -> (i32, i32, i32) {
    %c0_i32 = arith.constant 0 : i32
    %c0_i32_0 = arith.constant 0 : i32
    %c0_i32_1 = arith.constant 0 : i32
    return %arg0, %c0_i32, %c0_i32_0 : i32, i32, i32
  }
  func.func @transform_4(%arg0: i32) -> (i32, i32, i32) {
    %c0_i32 = arith.constant 0 : i32
    %c0_i32_0 = arith.constant 0 : i32
    %c0_i32_1 = arith.constant 0 : i32
    return %arg0, %c0_i32, %c0_i32_0 : i32, i32, i32
  }
}

</mosaic_0001>

<llo_original>
// kernel: tpu_custom_call.1
$region0: #{tpu_custom_call.1}
  #allocation0 [shape = 'u32[]', space=smem, size = 0x4, offset = 0x4, fixed_abs, tag = 'smem constant byte address 0x4 - core index']
  #allocation1 [shape = 'u32[144,128]{1,0:T(1,128)}', space=vmem, size = 0x12000, scoped, tag = 'internal scratch']
  %s0 = inlined_call_operand.hbm [shape: f32[2,1,16,128], index: 0, kind: input, shape index: {}]
  %s1 = inlined_call_operand.hbm [shape: f32[2,3,16,128], index: 1, kind: input, shape index: {}]
  %s2 = inlined_call_operand.hbm [shape: f32[2,1,16,128], index: 2, kind: input, shape index: {}]
  %s3 = inlined_call_operand.hbm [shape: f32[2,1,128], index: 3, kind: output, shape index: {0}]
  %s4 = inlined_call_operand.hbm [shape: f32[2,1,128], index: 4, kind: output, shape index: {1}]
  %5 = xla_tuple %s3, %s4
  %s6 = sld [smem:[#allocation0]]
  $region65: #{tpu_custom_call.1} parent=0
    _
  %s8 = ssub.s32 1, %s6
  %s9 = scalar_select 0, %s8, %s6
  $region1: #{tpu_custom_call.1} parent=0
    #allocation2 [shape = 'u8[16384]{0}', space=vmem, size = 0x4000, scoped, tag = 'input window, operand 0']
    #allocation3 [shape = 's32[2]{0}', space=sflag, size = 0x8, scoped, tag = 'scoped memory for tpu_custom_call.1']
    #allocation4 [shape = 's32[2]{0}', space=sflag, size = 0x8, scoped, tag = 'scoped memory for tpu_custom_call.1']
    #allocation5 [shape = 'u8[16384]{0}', space=vmem, size = 0x4000, scoped, tag = 'input window, operand 1']
    #allocation6 [shape = 's32[2]{0}', space=sflag, size = 0x8, scoped, tag = 'scoped memory for tpu_custom_call.1']
    #allocation7 [shape = 'u8[16384]{0}', space=vmem, size = 0x4000, scoped, tag = 'input window, operand 2']
    #allocation8 [shape = 'u8[1024]{0}', space=vmem, size = 0x400, scoped, tag = 'output window, operand 0']
    #allocation9 [shape = 'u8[1024]{0}', space=vmem, size = 0x400, scoped, tag = 'output window, operand 1']
    #allocation10 [shape = 's32[2]{0}', space=sflag, size = 0x8, scoped, tag = 'scoped memory for tpu_custom_call.1']
    %10 = vsyncpa [#allocation3], 0
    %s11 = scalar_lea.sflag [#allocation3], 1
    %12 = vsyncpa %s11, 0
    %13 = vsyncpa [#allocation6], 0
    %s14 = scalar_lea.sflag [#allocation6], 1
    %15 = vsyncpa %s14, 0
    %16 = vsyncpa [#allocation4], 0
    %s17 = scalar_lea.sflag [#allocation4], 1
    %18 = vsyncpa %s17, 0
    %19 = vsyncpa [#allocation10], 0
    %s20 = scalar_lea.sflag [#allocation10], 1
    %21 = vsyncpa %s20, 0
    loop: start=0, step=1, limit=4
    $region2: #{tpu_custom_call.1} parent=1 // loop_pre_header
      _
    $region3: #{tpu_custom_call.1} parent=1 // loop_header
      %s23 = sphi 0, %s27
      %p24 = scmp.ge.s32.totalorder %s23, 4
      %s33 = sphi 0, %s35
      %s36 = sphi 0, %s33
      %s37 = sphi 0, %s36
      %s53 = sphi 0, %s37
      %s59 = sphi 0, %s61
      %s62 = sphi 0, %s59
      %s63 = sphi 0, %s62
      %s79 = sphi 0, %s63
      %s85 = sphi 0, %s87
      %s88 = sphi 0, %s85
      %s89 = sphi 0, %s88
      %s105 = sphi 0, %s89
      %s111 = sphi 0, %s113
      %s114 = sphi 0, %s111
      %s115 = sphi 0, %s114
      %s131 = sphi 0, %s115
      %s137 = sphi 0, %s139
      %s140 = sphi 0, %s137
      %s141 = sphi 0, %s140
      %s157 = sphi 0, %s141
    $region4: #{tpu_custom_call.1} parent=1 // loop_header_branch
      %26 = sbr.rel (%p24) target = $region8
    $region5: #{tpu_custom_call.1} parent=1 // loop_body
      %s28 = ssub.s32 %s23, 1
      %s29 = ssub.s32 %s23, 2
      %s30 = sadd.s32 %s23, 1
      %s31 = ssub.s32 %s23, %s30
      %p32 = scmp.eq.s32.totalorder %s31, 0
      %s34 = sadd.s32 %s33, 1
      %s35 = scalar_select %p32, %s33, %s34
      %p38 = pneg %p32
      %p39 = scmp.eq.s32.totalorder %s23, 1
      %p40 = por %p38, %p39
      %p41 = scmp.ne.s32.totalorder %s33, %s36
      %p42 = scmp.eq.s32.totalorder %s23, 0
      %p43 = por %p41, %p42
      %p44 = scmp.ne.s32.totalorder %s33, %s36
      %p45 = scmp.eq.s32.totalorder %s28, 1
      %p46 = por %p44, %p45
      %p47 = scmp.ne.s32.totalorder %s36, %s37
      %p48 = scmp.eq.s32.totalorder %s28, 0
      %p49 = por %p47, %p48
      %p50 = scmp.ne.s32.totalorder %s36, %s37
      %p51 = scmp.eq.s32.totalorder %s29, 1
      %p52 = por %p50, %p51
      %p54 = scmp.ne.s32.totalorder %s37, %s53
      %p55 = scmp.eq.s32.totalorder %s29, 0
      %p56 = por %p54, %p55
      %s57 = ssub.s32 %s23, %s30
      %p58 = scmp.eq.s32.totalorder %s57, 0
      %s60 = sadd.s32 %s59, 1
      %s61 = scalar_select %p58, %s59, %s60
      %p64 = pneg %p58
      %p65 = scmp.eq.s32.totalorder %s23, 1
      %p66 = por %p64, %p65
      %p67 = scmp.ne.s32.totalorder %s59, %s62
      %p68 = scmp.eq.s32.totalorder %s23, 0
      %p69 = por %p67, %p68
      %p70 = scmp.ne.s32.totalorder %s59, %s62
      %p71 = scmp.eq.s32.totalorder %s28, 1
      %p72 = por %p70, %p71
      %p73 = scmp.ne.s32.totalorder %s62, %s63
      %p74 = scmp.eq.s32.totalorder %s28, 0
      %p75 = por %p73, %p74
      %p76 = scmp.ne.s32.totalorder %s62, %s63
      %p77 = scmp.eq.s32.totalorder %s29, 1
      %p78 = por %p76, %p77
      %p80 = scmp.ne.s32.totalorder %s63, %s79
      %p81 = scmp.eq.s32.totalorder %s29, 0
      %p82 = por %p80, %p81
      %s83 = ssub.s32 %s23, %s30
      %p84 = scmp.eq.s32.totalorder %s83, 0
      %s86 = sadd.s32 %s85, 1
      %s87 = scalar_select %p84, %s85, %s86
      %p90 = pneg %p84
      %p91 = scmp.eq.s32.totalorder %s23, 1
      %p92 = por %p90, %p91
      %p93 = scmp.ne.s32.totalorder %s85, %s88
      %p94 = scmp.eq.s32.totalorder %s23, 0
      %p95 = por %p93, %p94
      %p96 = scmp.ne.s32.totalorder %s85, %s88
      %p97 = scmp.eq.s32.totalorder %s28, 1
      %p98 = por %p96, %p97
      %p99 = scmp.ne.s32.totalorder %s88, %s89
      %p100 = scmp.eq.s32.totalorder %s28, 0
      %p101 = por %p99, %p100
      %p102 = scmp.ne.s32.totalorder %s88, %s89
      %p103 = scmp.eq.s32.totalorder %s29, 1
      %p104 = por %p102, %p103
      %p106 = scmp.ne.s32.totalorder %s89, %s105
      %p107 = scmp.eq.s32.totalorder %s29, 0
      %p108 = por %p106, %p107
      %s109 = ssub.s32 %s23, %s30
      %p110 = scmp.eq.s32.totalorder %s109, 0
      %s112 = sadd.s32 %s111, 1
      %s113 = scalar_select %p110, %s111, %s112
      %p116 = pneg %p110
      %p117 = scmp.eq.s32.totalorder %s23, 1
      %p118 = por %p116, %p117
      %p119 = scmp.ne.s32.totalorder %s111, %s114
      %p120 = scmp.eq.s32.totalorder %s23, 0
      %p121 = por %p119, %p120
      %p122 = scmp.ne.s32.totalorder %s111, %s114
      %p123 = scmp.eq.s32.totalorder %s28, 1
      %p124 = por %p122, %p123
      %p125 = scmp.ne.s32.totalorder %s114, %s115
      %p126 = scmp.eq.s32.totalorder %s28, 0
      %p127 = por %p125, %p126
      %p128 = scmp.ne.s32.totalorder %s114, %s115
      %p129 = scmp.eq.s32.totalorder %s29, 1
      %p130 = por %p128, %p129
      %p132 = scmp.ne.s32.totalorder %s115, %s131
      %p133 = scmp.eq.s32.totalorder %s29, 0
      %p134 = por %p132, %p133
      %s135 = ssub.s32 %s23, %s30
      %p136 = scmp.eq.s32.totalorder %s135, 0
      %s138 = sadd.s32 %s137, 1
      %s139 = scalar_select %p136, %s137, %s138
      %p142 = pneg %p136
      %p143 = scmp.eq.s32.totalorder %s23, 1
      %p144 = por %p142, %p143
      %p145 = scmp.ne.s32.totalorder %s137, %s140
      %p146 = scmp.eq.s32.totalorder %s23, 0
      %p147 = por %p145, %p146
      %p148 = scmp.ne.s32.totalorder %s137, %s140
      %p149 = scmp.eq.s32.totalorder %s28, 1
      %p150 = por %p148, %p149
      %p151 = scmp.ne.s32.totalorder %s140, %s141
      %p152 = scmp.eq.s32.totalorder %s28, 0
      %p153 = por %p151, %p152
      %p154 = scmp.ne.s32.totalorder %s140, %s141
      %p155 = scmp.eq.s32.totalorder %s29, 1
      %p156 = por %p154, %p155
      %p158 = scmp.ne.s32.totalorder %s141, %s157
      %p159 = scmp.eq.s32.totalorder %s29, 0
      %p160 = por %p158, %p159
      %p161 = scmp.le.s32.totalorder 1, %s23
      %p162 = scmp.lt.s32.totalorder %s23, 3
      %p163 = pnand %p161, %p162
      %p164 = pneg %p163
      // Predicated region
      $region9: #{tpu_custom_call.1} parent=5 // pred_check
        _
      $region10: #{tpu_custom_call.1} parent=5 // pred_check_branch
        %166 = sbr.rel (%p163) target = $region12
      $region11: #{tpu_custom_call.1} parent=5 // pred_region
        %s167 = ssub.s32 %s23, 1
      $region12: #{tpu_custom_call.1} parent=5 // pred_fallthru
        _
      %p168 = scmp.lt.s32.totalorder %s23, 2
      // Predicated region
      $region13: #{tpu_custom_call.1} parent=5 // pred_check
        %p169 = pneg %p168
      $region14: #{tpu_custom_call.1} parent=5 // pred_check_branch
        %171 = sbr.rel (%p169) target = $region16
      $region15: #{tpu_custom_call.1} parent=5 // pred_region
        // Predicated region
        $region17: #{tpu_custom_call.1} parent=15 // pred_check
          %p172 = pneg %p43
        $region18: #{tpu_custom_call.1} parent=15 // pred_check_branch
          %174 = sbr.rel (%p172) target = $region20
        $region19: #{tpu_custom_call.1} parent=15 // pred_region
          %s175 = sand.u32 %s33, 1
          %s176 = scalar_lea.sflag [#allocation3], %s175
          %s177 = sand.u32 %s33, 1
          %s178 = smul.addr %s177, 16
          %s179 = scalar_lea.vmem [#allocation2], %s178
          %s181 = ssub.s32 256, 256
          %182 = vsyncadd %s176, %s181
          %s183 = smul.addr %s23, 2
          %s184 = smul.addr %s183, 128
          %s185 = scalar_lea.hbm %s0, %s184
          %s186 = sshll.u32 %s179, 4
          %s187 = int_to_ptr.vmem [resolvable:$true] %s186
          %192 = dma.hbm_to_vmem [thread:$0]  %s185, 256, %s187, %s176, 128, 128, 8
        $region20: #{tpu_custom_call.1} parent=15 // pred_fallthru
          _
        // Predicated region
        $region21: #{tpu_custom_call.1} parent=15 // pred_check
          %p193 = pneg %p69
        $region22: #{tpu_custom_call.1} parent=15 // pred_check_branch
          %195 = sbr.rel (%p193) target = $region24
        $region23: #{tpu_custom_call.1} parent=15 // pred_region
          %s196 = sand.u32 %s23, 1
          %s197 = scalar_lea.sflag [#allocation6], %s196
          %s198 = sand.u32 %s59, 1
          %s199 = smul.addr %s198, 16
          %s200 = scalar_lea.vmem [#allocation5], %s199
          %s202 = ssub.s32 256, 256
          %203 = vsyncadd %s197, %s202
          %s204 = smul.addr %s23, 6
          %s205 = smul.addr %s204, 128
          %s206 = scalar_lea.hbm %s1, %s205
          %s207 = sshll.u32 %s200, 4
          %s208 = int_to_ptr.vmem [resolvable:$true] %s207
          %213 = dma.hbm_to_vmem [thread:$0]  %s206, 256, %s208, %s197, 128, 128, 8
        $region24: #{tpu_custom_call.1} parent=15 // pred_fallthru
          _
        // Predicated region
        $region25: #{tpu_custom_call.1} parent=15 // pred_check
          %p214 = pneg %p95
        $region26: #{tpu_custom_call.1} parent=15 // pred_check_branch
          %216 = sbr.rel (%p214) target = $region28
        $region27: #{tpu_custom_call.1} parent=15 // pred_region
          %s217 = sand.u32 %s23, 1
          %s218 = scalar_lea.sflag [#allocation6], %s217
          %s219 = sand.u32 %s85, 1
          %s220 = smul.addr %s219, 16
          %s221 = scalar_lea.vmem [#allocation7], %s220
          %s223 = ssub.s32 256, 256
          %224 = vsyncadd %s218, %s223
          %s225 = smul.addr %s23, 2
          %s226 = smul.addr %s225, 128
          %s227 = scalar_lea.hbm %s2, %s226
          %s228 = sshll.u32 %s221, 4
          %s229 = int_to_ptr.vmem [resolvable:$true] %s228
          %234 = dma.hbm_to_vmem [thread:$0]  %s227, 256, %s229, %s218, 128, 128, 8
        $region28: #{tpu_custom_call.1} parent=15 // pred_fallthru
          _
      $region16: #{tpu_custom_call.1} parent=5 // pred_fallthru
        _
      %p235 = scmp.le.s32.totalorder 1, %s23
      %p236 = scmp.lt.s32.totalorder %s23, 3
      %p237 = pnand %p235, %p236
      %p238 = pneg %p237
      // Predicated region
      $region29: #{tpu_custom_call.1} parent=5 // pred_check
        _
      $region30: #{tpu_custom_call.1} parent=5 // pred_check_branch
        %240 = sbr.rel (%p237) target = $region32
      $region31: #{tpu_custom_call.1} parent=5 // pred_region
        %s241 = ssub.s32 %s23, 1
        %s242 = sand.u32 %s36, 1
        %s243 = scalar_lea.sflag [#allocation3], %s242
        %s244 = sand.u32 %s36, 1
        %s245 = smul.addr %s244, 16
        %s246 = scalar_lea.vmem [#allocation2], %s245
        // Predicated region
        $region33: #{tpu_custom_call.1} parent=31 // pred_check
          %p247 = pneg %p49
        $region34: #{tpu_custom_call.1} parent=31 // pred_check_branch
          %249 = sbr.rel (%p247) target = $region36
        $region35: #{tpu_custom_call.1} parent=31 // pred_region
          %250 = dma.done %s243, 256
        $region36: #{tpu_custom_call.1} parent=31 // pred_fallthru
          _
        %s251 = sand.u32 %s28, 1
        %s252 = scalar_lea.sflag [#allocation6], %s251
        %s253 = sand.u32 %s62, 1
        %s254 = smul.addr %s253, 16
        %s255 = scalar_lea.vmem [#allocation5], %s254
        // Predicated region
        $region37: #{tpu_custom_call.1} parent=31 // pred_check
          %p256 = pneg %p75
        $region38: #{tpu_custom_call.1} parent=31 // pred_check_branch
          %258 = sbr.rel (%p256) target = $region40
        $region39: #{tpu_custom_call.1} parent=31 // pred_region
          %259 = dma.done %s252, 256
        $region40: #{tpu_custom_call.1} parent=31 // pred_fallthru
          _
        %s260 = sand.u32 %s28, 1
        %s261 = scalar_lea.sflag [#allocation6], %s260
        %s262 = sand.u32 %s88, 1
        %s263 = smul.addr %s262, 16
        %s264 = scalar_lea.vmem [#allocation7], %s263
        // Predicated region
        $region41: #{tpu_custom_call.1} parent=31 // pred_check
          %p265 = pneg %p101
        $region42: #{tpu_custom_call.1} parent=31 // pred_check_branch
          %267 = sbr.rel (%p265) target = $region44
        $region43: #{tpu_custom_call.1} parent=31 // pred_region
          %268 = dma.done %s261, 256
        $region44: #{tpu_custom_call.1} parent=31 // pred_fallthru
          _
        %s269 = sand.u32 %s36, 1
        %s270 = scalar_lea.sflag [#allocation3], %s269
        %s271 = sand.u32 %s36, 1
        %s272 = smul.addr %s271, 16
        %s273 = scalar_lea.vmem [#allocation2], %s272
        %p274 = pneg %p49
        %p275 = pneg %p46
        %s276 = sand.u32 %s28, 1
        %s277 = scalar_lea.sflag [#allocation6], %s276
        %s278 = sand.u32 %s62, 1
        %s279 = smul.addr %s278, 16
        %s280 = scalar_lea.vmem [#allocation5], %s279
        %p281 = pneg %p75
        %p282 = pneg %p72
        %s283 = sand.u32 %s28, 1
        %s284 = scalar_lea.sflag [#allocation6], %s283
        %s285 = sand.u32 %s88, 1
        %s286 = smul.addr %s285, 16
        %s287 = scalar_lea.vmem [#allocation7], %s286
        %p288 = pneg %p101
        %p289 = pneg %p98
        %p290 = pneg %p127
        %p291 = pneg %p124
        %s292 = sand.u32 %s114, 1
        %s293 = scalar_lea.sflag [#allocation4], %s292
        %s294 = sand.u32 %s114, 1
        %s295 = scalar_lea.vmem [#allocation8], %s294
        %p296 = pneg %p153
        %p297 = pneg %p150
        %s298 = sand.u32 %s140, 1
        %s299 = scalar_lea.sflag [#allocation10], %s298
        %s300 = sand.u32 %s140, 1
        %s301 = scalar_lea.vmem [#allocation9], %s300
        %v302 = vld [vmem:[%s246] sm:$0xff]
        %v303 = vld [vmem:[%s246 + $0x8] sm:$0xff]
        %v304 = vld [vmem:[%s255] sm:$0xff]
        %v305 = vld [vmem:[%s255 + $0x8] sm:$0xff]
        %v306 = vld [vmem:[%s264] sm:$0xff]
        %v307 = vld [vmem:[%s264 + $0x8] sm:$0xff]
        %v308 = vmax.f32 %v304, %v302
        %v309 = vmax.f32 %v305, %v303
        %v310 = vsub.f32 %v308, %v306
        %v311 = vsub.f32 %v309, %v307
        %v312 = vand.u32 2147483647, %v310
        %v313 = vand.u32 2147483647, %v311
        %v314 = vadd.f32 %v312, %v313
        %v315 = vrot.slane %v314, 4
        %v316 = vadd.f32 %v314, %v315
        %v317 = vrot.slane %v316, 2
        %v318 = vadd.f32 %v316, %v317
        %v319 = vrot.slane %v318, 1
        %v320 = vadd.f32 %v318, %v319
        %321 = vst [vmem:[%s295] sm:$0x1] %v320
        %vm324 = vcmask 1040384
        %v325 = vrot.slane %v304, 7
        %v326 = vrot.slane %v305, 7
        %v327 = vsel %vm324, %v325, %v326
        %v330 = vsel %vm324, 0.0, %v325
        %vm331 = vcmask 1046528
        %v332 = vrot.slane %v304, 1
        %v333 = vrot.slane %v305, 1
        %v334 = vsel %vm331, %v332, %v333
        %v337 = vsel %vm331, %v333, 0.0
        %v338 = vmul.f32 %v304, 2.0
        %v339 = vmul.f32 %v305, 2.0
        %v340 = vadd.f32 %v330, %v338
        %v341 = vadd.f32 %v327, %v339
        %v342 = vadd.f32 %v340, %v334
        %v343 = vadd.f32 %v341, %v337
        %v344 = vsub.f32 %v330, %v334
        %v345 = vsub.f32 %v327, %v337
        %348 = vrot.lane.b32.xlu0 %v342, 127
        %v349 = vpop.permute.xlu0 %348
        %350 = vrot.lane.b32.xlu0 %v343, 127
        %v351 = vpop.permute.xlu0 %350
        %vm354 = vcmask 1039360
        %v355 = vsel %vm354, %v349, 0.0
        %v356 = vsel %vm354, %v351, 0.0
        %357 = vrot.lane.b32.xlu0 %v342, 1
        %v358 = vpop.permute.xlu0 %357
        %359 = vrot.lane.b32.xlu0 %v343, 1
        %v360 = vpop.permute.xlu0 %359
        %vm363 = vcmask 7168
        %v364 = vsel %vm363, 0.0, %v358
        %v365 = vsel %vm363, 0.0, %v360
        %v366 = vsub.f32 %v355, %v364
        %v367 = vsub.f32 %v356, %v365
        %370 = vrot.lane.b32.xlu0 %v344, 1
        %v371 = vpop.permute.xlu0 %370
        %372 = vrot.lane.b32.xlu0 %v345, 1
        %v373 = vpop.permute.xlu0 %372
        %v376 = vsel %vm363, 0.0, %v371
        %v377 = vsel %vm363, 0.0, %v373
        %v378 = vmul.f32 %v344, 2.0
        %v379 = vmul.f32 %v345, 2.0
        %v380 = vadd.f32 %v376, %v378
        %v381 = vadd.f32 %v377, %v379
        %382 = vrot.lane.b32.xlu0 %v344, 127
        %v383 = vpop.permute.xlu0 %382
        %384 = vrot.lane.b32.xlu0 %v345, 127
        %v385 = vpop.permute.xlu0 %384
        %v388 = vsel %vm354, %v383, 0.0
        %v389 = vsel %vm354, %v385, 0.0
        %v390 = vadd.f32 %v380, %v388
        %v391 = vadd.f32 %v381, %v389
        %v392 = vand.u32 2147483647, %v366
        %v393 = vand.u32 2147483647, %v367
        %v394 = vand.u32 2147483647, %v390
        %v395 = vand.u32 2147483647, %v391
        %v396 = vadd.f32 %v392, %v394
        %v397 = vadd.f32 %v393, %v395
        %v400 = vrot.slane %v302, 7
        %v401 = vrot.slane %v303, 7
        %v402 = vsel %vm324, %v400, %v401
        %v405 = vsel %vm324, 0.0, %v400
        %v406 = vrot.slane %v302, 1
        %v407 = vrot.slane %v303, 1
        %v408 = vsel %vm331, %v406, %v407
        %v411 = vsel %vm331, %v407, 0.0
        %v412 = vmul.f32 %v302, 2.0
        %v413 = vmul.f32 %v303, 2.0
        %v414 = vadd.f32 %v405, %v412
        %v415 = vadd.f32 %v402, %v413
        %v416 = vadd.f32 %v414, %v408
        %v417 = vadd.f32 %v415, %v411
        %v418 = vsub.f32 %v405, %v408
        %v419 = vsub.f32 %v402, %v411
        %422 = vrot.lane.b32.xlu0 %v416, 127
        %v423 = vpop.permute.xlu0 %422
        %424 = vrot.lane.b32.xlu0 %v417, 127
        %v425 = vpop.permute.xlu0 %424
        %v428 = vsel %vm354, %v423, 0.0
        %v429 = vsel %vm354, %v425, 0.0
        %430 = vrot.lane.b32.xlu0 %v416, 1
        %v431 = vpop.permute.xlu0 %430
        %432 = vrot.lane.b32.xlu0 %v417, 1
        %v433 = vpop.permute.xlu0 %432
        %v436 = vsel %vm363, 0.0, %v431
        %v437 = vsel %vm363, 0.0, %v433
        %v438 = vsub.f32 %v428, %v436
        %v439 = vsub.f32 %v429, %v437
        %442 = vrot.lane.b32.xlu0 %v418, 1
        %v443 = vpop.permute.xlu0 %442
        %444 = vrot.lane.b32.xlu0 %v419, 1
        %v445 = vpop.permute.xlu0 %444
        %v448 = vsel %vm363, 0.0, %v443
        %v449 = vsel %vm363, 0.0, %v445
        %v450 = vmul.f32 %v418, 2.0
        %v451 = vmul.f32 %v419, 2.0
        %v452 = vadd.f32 %v448, %v450
        %v453 = vadd.f32 %v449, %v451
        %454 = vrot.lane.b32.xlu0 %v418, 127
        %v455 = vpop.permute.xlu0 %454
        %456 = vrot.lane.b32.xlu0 %v419, 127
        %v457 = vpop.permute.xlu0 %456
        %v460 = vsel %vm354, %v455, 0.0
        %v461 = vsel %vm354, %v457, 0.0
        %v462 = vadd.f32 %v452, %v460
        %v463 = vadd.f32 %v453, %v461
        %v464 = vand.u32 2147483647, %v438
        %v465 = vand.u32 2147483647, %v439
        %v466 = vand.u32 2147483647, %v462
        %v467 = vand.u32 2147483647, %v463
        %v468 = vadd.f32 %v464, %v466
        %v469 = vadd.f32 %v465, %v467
        %v472 = vrot.slane %v306, 7
        %v473 = vrot.slane %v307, 7
        %v474 = vsel %vm324, %v472, %v473
        %v477 = vsel %vm324, 0.0, %v472
        %v478 = vrot.slane %v306, 1
        %v479 = vrot.slane %v307, 1
        %v480 = vsel %vm331, %v478, %v479
        %v483 = vsel %vm331, %v479, 0.0
        %v484 = vmul.f32 %v306, 2.0
        %v485 = vmul.f32 %v307, 2.0
        %v486 = vadd.f32 %v477, %v484
        %v487 = vadd.f32 %v474, %v485
        %v488 = vadd.f32 %v486, %v480
        %v489 = vadd.f32 %v487, %v483
        %v490 = vsub.f32 %v477, %v480
        %v491 = vsub.f32 %v474, %v483
        %494 = vrot.lane.b32.xlu0 %v488, 127
        %v495 = vpop.permute.xlu0 %494
        %496 = vrot.lane.b32.xlu0 %v489, 127
        %v497 = vpop.permute.xlu0 %496
        %v500 = vsel %vm354, %v495, 0.0
        %v501 = vsel %vm354, %v497, 0.0
        %502 = vrot.lane.b32.xlu0 %v488, 1
        %v503 = vpop.permute.xlu0 %502
        %504 = vrot.lane.b32.xlu0 %v489, 1
        %v505 = vpop.permute.xlu0 %504
        %v508 = vsel %vm363, 0.0, %v503
        %v509 = vsel %vm363, 0.0, %v505
        %v510 = vsub.f32 %v500, %v508
        %v511 = vsub.f32 %v501, %v509
        %514 = vrot.lane.b32.xlu0 %v490, 1
        %v515 = vpop.permute.xlu0 %514
        %516 = vrot.lane.b32.xlu0 %v491, 1
        %v517 = vpop.permute.xlu0 %516
        %v520 = vsel %vm363, 0.0, %v515
        %v521 = vsel %vm363, 0.0, %v517
        %v522 = vmul.f32 %v490, 2.0
        %v523 = vmul.f32 %v491, 2.0
        %v524 = vadd.f32 %v520, %v522
        %v525 = vadd.f32 %v521, %v523
        %526 = vrot.lane.b32.xlu0 %v490, 127
        %v527 = vpop.permute.xlu0 %526
        %528 = vrot.lane.b32.xlu0 %v491, 127
        %v529 = vpop.permute.xlu0 %528
        %v532 = vsel %vm354, %v527, 0.0
        %v533 = vsel %vm354, %v529, 0.0
        %v534 = vadd.f32 %v524, %v532
        %v535 = vadd.f32 %v525, %v533
        %v536 = vand.u32 2147483647, %v510
        %v537 = vand.u32 2147483647, %v511
        %v538 = vand.u32 2147483647, %v534
        %v539 = vand.u32 2147483647, %v535
        %v540 = vadd.f32 %v536, %v538
        %v541 = vadd.f32 %v537, %v539
        %v542 = vmax.f32 %v396, %v468
        %v543 = vmax.f32 %v397, %v469
        %v544 = vsub.f32 %v542, %v540
        %v545 = vsub.f32 %v543, %v541
        %v546 = vand.u32 2147483647, %v544
        %v547 = vand.u32 2147483647, %v545
        %v548 = vadd.f32 %v546, %v547
        %v549 = vrot.slane %v548, 4
        %v550 = vadd.f32 %v548, %v549
        %v551 = vrot.slane %v550, 2
        %v552 = vadd.f32 %v550, %v551
        %v553 = vrot.slane %v552, 1
        %v554 = vadd.f32 %v552, %v553
        %555 = vst [vmem:[%s301] sm:$0x1] %v554
        %s556 = sand.u32 %s114, 1
        %s557 = scalar_lea.sflag [#allocation4], %s556
        %s558 = sand.u32 %s114, 1
        %s559 = scalar_lea.vmem [#allocation8], %s558
        %s560 = sand.u32 %s140, 1
        %s561 = scalar_lea.sflag [#allocation10], %s560
        %s562 = sand.u32 %s140, 1
        %s563 = scalar_lea.vmem [#allocation9], %s562
        // Predicated region
        $region45: #{tpu_custom_call.1} parent=31 // pred_check
          %p564 = pneg %p124
        $region46: #{tpu_custom_call.1} parent=31 // pred_check_branch
          %566 = sbr.rel (%p564) target = $region48
        $region47: #{tpu_custom_call.1} parent=31 // pred_region
          %s568 = ssub.s32 16, 16
          %569 = vsyncadd %s557, %s568
          %s570 = smul.addr %s28, 16
          %s571 = scalar_lea.hbm %s3, %s570
          %s573 = sshll.u32 %s559, 4
          %s574 = int_to_ptr.vmem [resolvable:$true] %s573
          %576 = dma.vmem_to_hbm [thread:$0]  %s574, 16, %s571, %s557
        $region48: #{tpu_custom_call.1} parent=31 // pred_fallthru
          _
        // Predicated region
        $region49: #{tpu_custom_call.1} parent=31 // pred_check
          %p577 = pneg %p150
        $region50: #{tpu_custom_call.1} parent=31 // pred_check_branch
          %579 = sbr.rel (%p577) target = $region52
        $region51: #{tpu_custom_call.1} parent=31 // pred_region
          %s581 = ssub.s32 16, 16
          %582 = vsyncadd %s561, %s581
          %s583 = smul.addr %s28, 16
          %s584 = scalar_lea.hbm %s4, %s583
          %s586 = sshll.u32 %s563, 4
          %s587 = int_to_ptr.vmem [resolvable:$true] %s586
          %589 = dma.vmem_to_hbm [thread:$0]  %s587, 16, %s584, %s561
        $region52: #{tpu_custom_call.1} parent=31 // pred_fallthru
          _
      $region32: #{tpu_custom_call.1} parent=5 // pred_fallthru
        _
      %p590 = scmp.le.s32.totalorder 2, %s23
      // Predicated region
      $region53: #{tpu_custom_call.1} parent=5 // pred_check
        %p591 = pneg %p590
      $region54: #{tpu_custom_call.1} parent=5 // pred_check_branch
        %593 = sbr.rel (%p591) target = $region56
      $region55: #{tpu_custom_call.1} parent=5 // pred_region
        %s594 = ssub.s32 %s23, 2
        // Predicated region
        $region57: #{tpu_custom_call.1} parent=55 // pred_check
          %p595 = pneg %p130
        $region58: #{tpu_custom_call.1} parent=55 // pred_check_branch
          %597 = sbr.rel (%p595) target = $region60
        $region59: #{tpu_custom_call.1} parent=55 // pred_region
          %s598 = sand.u32 %s115, 1
          %s599 = scalar_lea.sflag [#allocation4], %s598
          %s600 = sand.u32 %s115, 1
          %s601 = scalar_lea.vmem [#allocation8], %s600
          %602 = dma.done %s599, 16
        $region60: #{tpu_custom_call.1} parent=55 // pred_fallthru
          _
        // Predicated region
        $region61: #{tpu_custom_call.1} parent=55 // pred_check
          %p603 = pneg %p156
        $region62: #{tpu_custom_call.1} parent=55 // pred_check_branch
          %605 = sbr.rel (%p603) target = $region64
        $region63: #{tpu_custom_call.1} parent=55 // pred_region
          %s606 = sand.u32 %s141, 1
          %s607 = scalar_lea.sflag [#allocation10], %s606
          %s608 = sand.u32 %s141, 1
          %s609 = scalar_lea.vmem [#allocation9], %s608
          %610 = dma.done %s607, 16
        $region64: #{tpu_custom_call.1} parent=55 // pred_fallthru
          _
      $region56: #{tpu_custom_call.1} parent=5 // pred_fallthru
        _
    $region6: #{tpu_custom_call.1} parent=1 // loop_footer
      %s27 = sadd.s32 1, %s23
    $region7: #{tpu_custom_call.1} parent=1 // loop_footer_branch
      %22 = sbr.rel target = $region3
    $region8: #{tpu_custom_call.1} parent=1 // loop_exit
      _
    %611 = vsyncpa [#allocation3], 1
    %s612 = scalar_lea.sflag [#allocation3], 1
    %613 = vsyncpa %s612, 1
    %614 = vsyncpa [#allocation6], 1
    %s615 = scalar_lea.sflag [#allocation6], 1
    %616 = vsyncpa %s615, 1
    %617 = vsyncpa [#allocation4], 1
    %s618 = scalar_lea.sflag [#allocation4], 1
    %619 = vsyncpa %s618, 1
    %620 = vsyncpa [#allocation10], 1
    %s621 = scalar_lea.sflag [#allocation10], 1
    %622 = vsyncpa %s621, 1

</llo_original>
